<compile_context>
chip_gen: v7x
topology: tpu7x:2x2x1
jax: 0.10.0
libtpu: 0.0.40
codegen_flags: <defaults>
</compile_context>

<pallas_src>
import math

import jax
import jax.numpy as jnp
import numpy as np
from jax.experimental import pallas as pl
from jax.experimental.pallas import tpu as pltpu


# ---------------------------------------------------------------------------
# Slope computation (mirrors ALiBiPositionalBias._compute_slopes exactly)
# ---------------------------------------------------------------------------
def _compute_slopes(heads: int):
    def slopes_power_of_2(n):
        start = 2 ** (-(2 ** (-(math.log2(n) - 3))))
        ratio = start
        return [start * ratio ** i for i in range(n)]

    if math.log2(heads).is_integer():
        return slopes_power_of_2(heads)
    closest = 2 ** math.floor(math.log2(heads))
    return (
        slopes_power_of_2(closest)
        + slopes_power_of_2(2 * closest)[0::2][: heads - closest]
    )


# ---------------------------------------------------------------------------
# Pallas kernels (heads folded into the output block; grid = (I/tI, J/tJ))
# ---------------------------------------------------------------------------
def _alibi_sym_kernel(slopes_ref, k_ref, o_ref):
    # slopes_ref: SMEM f32[H]; k_ref: SMEM i32[1]; o_ref: VMEM [H, tI, tJ]
    it = pl.program_id(0)
    jt = pl.program_id(1)
    H, tI, tJ = o_ref.shape
    k = k_ref[0]
    ri = jax.lax.broadcasted_iota(jnp.int32, (tI, tJ), 0) + it * tI
    ci = jax.lax.broadcasted_iota(jnp.int32, (tI, tJ), 1) + jt * tJ
    bias = (-jnp.abs(ci - (ri + k))).astype(jnp.float32)
    for h in range(H):  # static unroll over the folded head axis
        o_ref[h] = (slopes_ref[h] * bias).astype(o_ref.dtype)


def _alibi_asym_kernel(slopes_ref, k_ref, o_ref):
    # slopes_ref: SMEM f32[2*H]  laid out as [slopes0..., slopes1...]
    it = pl.program_id(0)
    jt = pl.program_id(1)
    H, tI, tJ = o_ref.shape
    k = k_ref[0]
    ri = jax.lax.broadcasted_iota(jnp.int32, (tI, tJ), 0) + it * tI
    ci = jax.lax.broadcasted_iota(jnp.int32, (tI, tJ), 1) + jt * tJ
    bias = (-jnp.abs(ci - (ri + k))).astype(jnp.float32)
    tril = jnp.where(ri >= ci, bias, 0.0)  # torch.tril (diag included)
    triu = jnp.where(ri <= ci, bias, 0.0)  # torch.triu (diag included)
    for h in range(H):
        o_ref[h] = (slopes_ref[h] * tril + slopes_ref[H + h] * triu).astype(
            o_ref.dtype
        )


# ---------------------------------------------------------------------------
# Tile planning
# ---------------------------------------------------------------------------
_BLOCK_BUDGET = 7 << 20  # bytes per (H, tI, tJ) output block; x3 buffers ~= 21 MiB
_VMEM_CAP = 32 << 20     # safe scoped-VMEM cap on every generation (v7x worst case)


def _plan_tiles(i: int, j: int, H: int, itemsize: int):
    align_i = max(8, 32 // itemsize)  # 8 for f32, 16 for bf16, 32 for int8
    min_ti = align_i if (i >= align_i and i % align_i == 0) else i

    # --- tJ: prefer full-J contiguous writeback rows ---
    if (H * min_ti * j * itemsize <= _BLOCK_BUDGET) or (j % 128 != 0) or (j <= 128):
        # TODO(synk): for very large j that is not a multiple of 128 this takes
        # the full-extent fallback (masked stores / possibly oversized block);
        # padding j up to a multiple of 128 would be the cleaner fix.
        tJ = j
    else:
        tJ = 128
        for m in range(j // 128, 0, -1):
            t = m * 128
            if j % t == 0 and H * min_ti * t * itemsize <= _BLOCK_BUDGET:
                tJ = t
                break

    # --- tI: largest aligned divisor of i that keeps the block in budget ---
    if i <= align_i or i % align_i != 0:
        tI = i
    else:
        tI = align_i
        for m in range(i // align_i, 0, -1):
            t = m * align_i
            if i % t == 0 and H * t * tJ * itemsize <= _BLOCK_BUDGET:
                tI = t
                break

    # --- v7x: keep >=2 blocks along a "parallel" axis so both TCs get work ---
    if (pl.cdiv(i, tI) * pl.cdiv(j, tJ)) <= 1 and i % align_i == 0 and i >= 2 * align_i:
        for m in range(i // (2 * align_i), 0, -1):
            t = m * align_i
            if i % t == 0:
                tI = t
                break

    return tI, tJ


# ---------------------------------------------------------------------------
# Module-like wrapper
# ---------------------------------------------------------------------------
class ALiBiPositionalBiasPallas:
    def __init__(self, heads: int, total_heads: int, symmetric: bool = True,
                 out_dtype=jnp.float32):
        self.heads = heads
        self.total_heads = total_heads
        self.symmetric = symmetric
        self.out_dtype = jnp.dtype(out_dtype)

        slopes = np.asarray(_compute_slopes(heads), dtype=np.float32)  # (heads,)
        pad = max(total_heads - heads, 0)
        if symmetric:
            self._slopes_smem = jnp.asarray(np.pad(slopes, (0, pad)), jnp.float32)
        else:
            s0 = np.pad(slopes, (0, pad))
            s1 = np.pad(np.roll(slopes, -1), (0, pad))
            self._slopes_smem = jnp.asarray(np.concatenate([s0, s1]), jnp.float32)

    def _build(self, i: int, j: int, tI: int, tJ: int, buffered: bool):
        H = self.total_heads
        itemsize = self.out_dtype.itemsize
        grid = (pl.cdiv(i, tI), pl.cdiv(j, tJ))

        idx_map = lambda it, jt, _slopes, _k: (0, it, jt)
        if buffered:
            out_spec = pl.BlockSpec((H, tI, tJ), idx_map,
                                    pipeline_mode=pl.Buffered(3))
            n_buf = 3
        else:
            out_spec = pl.BlockSpec((H, tI, tJ), idx_map)
            n_buf = 2

        block_bytes = H * tI * tJ * itemsize
        tmp_bytes = (1 if self.symmetric else 3) * tI * tJ * 4  # in-kernel temporaries
        need = n_buf * block_bytes + tmp_bytes
        vmem_limit = int(min(max(2 * need, 16 << 20), _VMEM_CAP))
        if need + (4 << 20) > vmem_limit:
            vmem_limit = int(need + (8 << 20))  # oversized fallback blocks

        flops = (2 if self.symmetric else 4) * H * i * j
        cost = pl.CostEstimate(flops=int(flops), transcendentals=0,
                               bytes_accessed=int(H * i * j * itemsize))

        kernel = _alibi_sym_kernel if self.symmetric else _alibi_asym_kernel
        return pl.pallas_call(
            kernel,
            out_shape=jax.ShapeDtypeStruct((H, i, j), self.out_dtype),
            grid_spec=pltpu.PrefetchScalarGridSpec(
                num_scalar_prefetch=2,  # slopes + k land in SMEM
                grid=grid,
                in_specs=[],
                out_specs=out_spec,
            ),
            compiler_params=pltpu.CompilerParams(
                dimension_semantics=("parallel", "parallel"),
                vmem_limit_bytes=vmem_limit,
            ),
            cost_estimate=cost,
        )

    def __call__(self, i: int, j: int, k: int = 0):
        # TODO(synk): the forward(bias=...) precomputed-bias fast path is not
        # plumbed through the kernel; only the bias=None path is implemented.
        tI, tJ = _plan_tiles(i, j, self.total_heads, self.out_dtype.itemsize)
        k_arr = jnp.asarray([k], dtype=jnp.int32)
        try:
            return self._build(i, j, tI, tJ, buffered=True)(self._slopes_smem, k_arr)
        except Exception:
            # Fall back to default double-buffering if pipeline_mode=Buffered(3)
            # on an output spec is rejected by the installed jax/Mosaic.
            return self._build(i, j, tI, tJ, buffered=False)(self._slopes_smem, k_arr)


# ---------------------------------------------------------------------------
# Pure-numpy reference (mirrors the PyTorch forward, bias=None path)
# ---------------------------------------------------------------------------
def _ref_forward(heads, total_heads, symmetric, i, j, k=0):
    slopes = np.asarray(_compute_slopes(heads), dtype=np.float32)
    i_ar = np.arange(k, i + k, dtype=np.int32)
    j_ar = np.arange(j, dtype=np.int32)
    bias = -np.abs(j_ar[None, None, :] - i_ar[None, :, None]).astype(np.float32)
    pad = max(total_heads - heads, 0)
    if symmetric:
        s = np.pad(slopes, (0, pad)).reshape(-1, 1, 1)
        return s * bias
    s0 = np.pad(slopes, (0, pad)).reshape(-1, 1, 1)
    s1 = np.pad(np.roll(slopes, -1), (0, pad)).reshape(-1, 1, 1)
    tril = np.tril(bias[0])[None]
    triu = np.triu(bias[0])[None]
    return s0 * tril + s1 * triu


if __name__ == "__main__":
    key = jax.random.PRNGKey(0)  # inputs are deterministic ints; key kept per protocol
    del key

    heads, total_heads = 6, 8

    # Small shapes: full-extent J, I split in two (feeds both TCs on v7x).
    for symmetric in (True, False):
        mod = ALiBiPositionalBiasPallas(heads, total_heads, symmetric=symmetric)
        out = jax.block_until_ready(mod(16, 16, 3))
        ref = _ref_forward(heads, total_heads, symmetric, 16, 16, 3)
        assert out.shape == (total_heads, 16, 16)
        np.testing.assert_allclose(np.asarray(out), ref, rtol=1e-6, atol=1e-6)

    # Larger case exercising folded-H blocks, full-J contiguous rows, I tiling.
    for symmetric in (True, False):
        mod = ALiBiPositionalBiasPallas(heads, total_heads, symmetric=symmetric)
        i, j, k = 192, 256, 5
        out = jax.block_until_ready(mod(i, j, k))
        ref = _ref_forward(heads, total_heads, symmetric, i, j, k)
        assert out.shape == (total_heads, i, j)
        np.testing.assert_allclose(np.asarray(out), ref, rtol=1e-6, atol=1e-6)

    # bf16 output path (halves HBM bytes written; compute in f32, cast on store).
    mod = ALiBiPositionalBiasPallas(heads, total_heads, symmetric=True,
                                    out_dtype=jnp.bfloat16)
    i, j, k = 64, 128, 2
    out = jax.block_until_ready(mod(i, j, k))
    ref = _ref_forward(heads, total_heads, True, i, j, k)
    assert out.dtype == jnp.bfloat16 and out.shape == (total_heads, i, j)
    np.testing.assert_allclose(np.asarray(out).astype(np.float32), ref,
                               rtol=1e-2, atol=1e-2)

    print("KERNEL_OK")
</pallas_src>

<mosaic_0001>
module attributes {stable_mosaic.version = 11 : i64} {
  func.func @_alibi_sym_kernel(%arg0: i32, %arg1: i32, %arg2: memref<8xf32, #tpu.memory_space<smem>>, %arg3: memref<1xi32, #tpu.memory_space<smem>>, %arg4: memref<8x8x16xf32, #tpu.memory_space<vmem>>) attributes {dimension_semantics = [#tpu.dimension_semantics<parallel>, #tpu.dimension_semantics<parallel>], iteration_bounds = array<i64: 2, 1>, scalar_prefetch = 2 : i64, scratch_operands = 0 : i64, tpu.core_type = #tpu.core_type<tc>, window_params = [{transform_indices = @transform_0, window_bounds = array<i64: 8, 8, 16>}]} {
    %c0 = arith.constant 0 : index
    %0 = memref.load %arg3[%c0] : memref<1xi32, #tpu.memory_space<smem>>
    %1 = tpu.iota {dimensions = array<i32: 0>} : vector<8x16xi32>
    %c8_i32 = arith.constant 8 : i32
    %2 = arith.muli %arg0, %c8_i32 : i32
    %3 = vector.broadcast %2 : i32 to vector<8x16xi32>
    %4 = arith.addi %1, %3 : vector<8x16xi32>
    %5 = tpu.iota {dimensions = array<i32: 1>} : vector<8x16xi32>
    %c16_i32 = arith.constant 16 : i32
    %6 = arith.muli %arg1, %c16_i32 : i32
    %7 = vector.broadcast %6 : i32 to vector<8x16xi32>
    %8 = arith.addi %5, %7 : vector<8x16xi32>
    %9 = vector.broadcast %0 : i32 to vector<8x16xi32>
    %10 = arith.addi %4, %9 : vector<8x16xi32>
    %11 = arith.subi %8, %10 : vector<8x16xi32>
    %12 = math.absi %11 : vector<8x16xi32>
    %c0_i32 = arith.constant 0 : i32
    %13 = vector.broadcast %c0_i32 : i32 to vector<8x16xi32>
    %14 = arith.subi %13, %12 : vector<8x16xi32>
    %15 = arith.sitofp %14 : vector<8x16xi32> to vector<8x16xf32>
    %c0_0 = arith.constant 0 : index
    %16 = memref.load %arg2[%c0_0] : memref<8xf32, #tpu.memory_space<smem>>
    %17 = vector.broadcast %16 : f32 to vector<8x16xf32>
    %18 = arith.mulf %17, %15 : vector<8x16xf32>
    %c0_1 = arith.constant 0 : index
    %c0_2 = arith.constant 0 : index
    %c0_3 = arith.constant 0 : index
    %19 = vector.load %arg4[%c0_1, %c0_2, %c0_3] : memref<8x8x16xf32, #tpu.memory_space<vmem>>, vector<1x8x16xf32>
    %20 = vector.shape_cast %19 : vector<1x8x16xf32> to vector<8x16xf32>
    %21 = vector.shape_cast %18 : vector<8x16xf32> to vector<1x8x16xf32>
    tpu.vector_store %arg4[%c0_1, %c0_2, %c0_3], %21 {strides = array<i32>} : memref<8x8x16xf32, #tpu.memory_space<vmem>>, vector<1x8x16xf32>,
    %c1 = arith.constant 1 : index
    %22 = memref.load %arg2[%c1] : memref<8xf32, #tpu.memory_space<smem>>
    %23 = vector.broadcast %22 : f32 to vector<8x16xf32>
    %24 = arith.mulf %23, %15 : vector<8x16xf32>
    %c1_4 = arith.constant 1 : index
    %c0_5 = arith.constant 0 : index
    %c0_6 = arith.constant 0 : index
    %25 = vector.load %arg4[%c1_4, %c0_5, %c0_6] : memref<8x8x16xf32, #tpu.memory_space<vmem>>, vector<1x8x16xf32>
    %26 = vector.shape_cast %25 : vector<1x8x16xf32> to vector<8x16xf32>
    %27 = vector.shape_cast %24 : vector<8x16xf32> to vector<1x8x16xf32>
    tpu.vector_store %arg4[%c1_4, %c0_5, %c0_6], %27 {strides = array<i32>} : memref<8x8x16xf32, #tpu.memory_space<vmem>>, vector<1x8x16xf32>,
    %c2 = arith.constant 2 : index
    %28 = memref.load %arg2[%c2] : memref<8xf32, #tpu.memory_space<smem>>
    %29 = vector.broadcast %28 : f32 to vector<8x16xf32>
    %30 = arith.mulf %29, %15 : vector<8x16xf32>
    %c2_7 = arith.constant 2 : index
    %c0_8 = arith.constant 0 : index
    %c0_9 = arith.constant 0 : index
    %31 = vector.load %arg4[%c2_7, %c0_8, %c0_9] : memref<8x8x16xf32, #tpu.memory_space<vmem>>, vector<1x8x16xf32>
    %32 = vector.shape_cast %31 : vector<1x8x16xf32> to vector<8x16xf32>
    %33 = vector.shape_cast %30 : vector<8x16xf32> to vector<1x8x16xf32>
    tpu.vector_store %arg4[%c2_7, %c0_8, %c0_9], %33 {strides = array<i32>} : memref<8x8x16xf32, #tpu.memory_space<vmem>>, vector<1x8x16xf32>,
    %c3 = arith.constant 3 : index
    %34 = memref.load %arg2[%c3] : memref<8xf32, #tpu.memory_space<smem>>
    %35 = vector.broadcast %34 : f32 to vector<8x16xf32>
    %36 = arith.mulf %35, %15 : vector<8x16xf32>
    %c3_10 = arith.constant 3 : index
    %c0_11 = arith.constant 0 : index
    %c0_12 = arith.constant 0 : index
    %37 = vector.load %arg4[%c3_10, %c0_11, %c0_12] : memref<8x8x16xf32, #tpu.memory_space<vmem>>, vector<1x8x16xf32>
    %38 = vector.shape_cast %37 : vector<1x8x16xf32> to vector<8x16xf32>
    %39 = vector.shape_cast %36 : vector<8x16xf32> to vector<1x8x16xf32>
    tpu.vector_store %arg4[%c3_10, %c0_11, %c0_12], %39 {strides = array<i32>} : memref<8x8x16xf32, #tpu.memory_space<vmem>>, vector<1x8x16xf32>,
    %c4 = arith.constant 4 : index
    %40 = memref.load %arg2[%c4] : memref<8xf32, #tpu.memory_space<smem>>
    %41 = vector.broadcast %40 : f32 to vector<8x16xf32>
    %42 = arith.mulf %41, %15 : vector<8x16xf32>
    %c4_13 = arith.constant 4 : index
    %c0_14 = arith.constant 0 : index
    %c0_15 = arith.constant 0 : index
    %43 = vector.load %arg4[%c4_13, %c0_14, %c0_15] : memref<8x8x16xf32, #tpu.memory_space<vmem>>, vector<1x8x16xf32>
    %44 = vector.shape_cast %43 : vector<1x8x16xf32> to vector<8x16xf32>
    %45 = vector.shape_cast %42 : vector<8x16xf32> to vector<1x8x16xf32>
    tpu.vector_store %arg4[%c4_13, %c0_14, %c0_15], %45 {strides = array<i32>} : memref<8x8x16xf32, #tpu.memory_space<vmem>>, vector<1x8x16xf32>,
    %c5 = arith.constant 5 : index
    %46 = memref.load %arg2[%c5] : memref<8xf32, #tpu.memory_space<smem>>
    %47 = vector.broadcast %46 : f32 to vector<8x16xf32>
    %48 = arith.mulf %47, %15 : vector<8x16xf32>
    %c5_16 = arith.constant 5 : index
    %c0_17 = arith.constant 0 : index
    %c0_18 = arith.constant 0 : index
    %49 = vector.load %arg4[%c5_16, %c0_17, %c0_18] : memref<8x8x16xf32, #tpu.memory_space<vmem>>, vector<1x8x16xf32>
    %50 = vector.shape_cast %49 : vector<1x8x16xf32> to vector<8x16xf32>
    %51 = vector.shape_cast %48 : vector<8x16xf32> to vector<1x8x16xf32>
    tpu.vector_store %arg4[%c5_16, %c0_17, %c0_18], %51 {strides = array<i32>} : memref<8x8x16xf32, #tpu.memory_space<vmem>>, vector<1x8x16xf32>,
    %c6 = arith.constant 6 : index
    %52 = memref.load %arg2[%c6] : memref<8xf32, #tpu.memory_space<smem>>
    %53 = vector.broadcast %52 : f32 to vector<8x16xf32>
    %54 = arith.mulf %53, %15 : vector<8x16xf32>
    %c6_19 = arith.constant 6 : index
    %c0_20 = arith.constant 0 : index
    %c0_21 = arith.constant 0 : index
    %55 = vector.load %arg4[%c6_19, %c0_20, %c0_21] : memref<8x8x16xf32, #tpu.memory_space<vmem>>, vector<1x8x16xf32>
    %56 = vector.shape_cast %55 : vector<1x8x16xf32> to vector<8x16xf32>
    %57 = vector.shape_cast %54 : vector<8x16xf32> to vector<1x8x16xf32>
    tpu.vector_store %arg4[%c6_19, %c0_20, %c0_21], %57 {strides = array<i32>} : memref<8x8x16xf32, #tpu.memory_space<vmem>>, vector<1x8x16xf32>,
    %c7 = arith.constant 7 : index
    %58 = memref.load %arg2[%c7] : memref<8xf32, #tpu.memory_space<smem>>
    %59 = vector.broadcast %58 : f32 to vector<8x16xf32>
    %60 = arith.mulf %59, %15 : vector<8x16xf32>
    %c7_22 = arith.constant 7 : index
    %c0_23 = arith.constant 0 : index
    %c0_24 = arith.constant 0 : index
    %61 = vector.load %arg4[%c7_22, %c0_23, %c0_24] : memref<8x8x16xf32, #tpu.memory_space<vmem>>, vector<1x8x16xf32>
    %62 = vector.shape_cast %61 : vector<1x8x16xf32> to vector<8x16xf32>
    %63 = vector.shape_cast %60 : vector<8x16xf32> to vector<1x8x16xf32>
    tpu.vector_store %arg4[%c7_22, %c0_23, %c0_24], %63 {strides = array<i32>} : memref<8x8x16xf32, #tpu.memory_space<vmem>>, vector<1x8x16xf32>,
    return
  }
  func.func @transform_0(%arg0: i32, %arg1: i32, %arg2: memref<8xf32, #tpu.memory_space<smem>>, %arg3: memref<1xi32, #tpu.memory_space<smem>>) -> (i32, i32, i32) {
    %c0_i32 = arith.constant 0 : i32
    %c0_i32_0 = arith.constant 0 : i32
    return %c0_i32, %arg0, %arg1 : i32, i32, i32
  }
}

</mosaic_0001>

<llo_original>
// kernel: tpu_custom_call.1
$region0: #{tpu_custom_call.1}
  #allocation0 [shape = 'u32[]', space=smem, size = 0x4, offset = 0x4, fixed_abs, tag = 'smem constant byte address 0x4 - core index']
  #allocation1 [shape = 'u32[144,128]{1,0:T(1,128)}', space=vmem, size = 0x12000, scoped, tag = 'internal scratch']
  #allocation2 [shape = 's32[1]{0}', space=sflag, size = 0x4, scoped, tag = 'scoped memory for tpu_custom_call.1']
  #allocation3 [shape = 'u8[512]{0}', space=smem, size = 0x200, scoped, tag = 'prefetched SMEM operand 0']
  #allocation4 [shape = 's32[1]{0:T(128)S(6)}', space=smem, size = 0x200, scoped, tag = 'prefetched SMEM operand 1']
  %s0 = inlined_call_operand.vmem [shape: f32[8], index: 0, kind: input, shape index: {}]
  %s1 = inlined_call_operand.<no memory space> [shape: s32[1], index: 1, kind: input, shape index: {}]
  %s2 = inlined_call_operand.hbm [shape: f32[8,16,16], index: 2, kind: output, shape index: {}]
  %s3 = sld [smem:[#allocation0]]
  $region25: #{tpu_custom_call.1} parent=0
    _
  %s5 = ssub.s32 1, %s3
  %s6 = scalar_select 0, %s5, %s3
  %s7 = sshll.u32 %s0, 4
  %s8 = int_to_ptr.vmem [resolvable:$true] %s7
  %10 = dma.vmem_to_smem %s8, 16, [#allocation3], [#allocation2]
  %11 = sst [smem:[#allocation4]] %s1
  %12 = dma.done [#allocation2], 16
  %13 = sfence
  $region1: #{tpu_custom_call.1} parent=0
    #allocation5 [shape = 'u8[65536]{0}', space=vmem, size = 0x10000, scoped, tag = 'output window, operand 0']
    #allocation6 [shape = 's32[2]{0}', space=sflag, size = 0x8, scoped, tag = 'scoped memory for tpu_custom_call.1']
    %14 = vsyncpa [#allocation6], 0
    %s15 = scalar_lea.sflag [#allocation6], 1
    %16 = vsyncpa %s15, 0
    loop: start=0, step=1, limit=3
    $region2: #{tpu_custom_call.1} parent=1 // loop_pre_header
      _
    $region3: #{tpu_custom_call.1} parent=1 // loop_header
      %s18 = sphi 0, %s22
      %p19 = scmp.ge.s32.totalorder %s18, 3
      %s24 = sphi 0, %s34
      %s25 = sphi 0, %s30
      %s26 = sphi 0, %s24
      %s27 = sphi 0, %s25
      %s39 = sphi 0, %s41
      %s42 = sphi 0, %s39
      %s52 = sphi 0, %s42
    $region4: #{tpu_custom_call.1} parent=1 // loop_header_branch
      %21 = sbr.rel (%p19) target = $region8
    $region5: #{tpu_custom_call.1} parent=1 // loop_body
      %s23 = ssub.s32 %s18, 1
      %s28 = sadd.s32 1, %s25
      %p29 = scmp.ge.s32.totalorder %s28, 1
      %s30 = scalar_select %p29, 0, %s28
      %s31 = sadd.s32 1, %s24
      %s32 = scalar_select %p29, %s31, %s24
      %p33 = scmp.ge.s32.totalorder %s32, 2
      %s34 = scalar_select %p33, 0, %s32
      %s35 = ssub.s32 %s24, %s34
      %s36 = ssub.s32 %s25, %s30
      %s37 = sor.u32 %s35, %s36
      %p38 = scmp.eq.s32.totalorder %s37, 0
      %s40 = sadd.s32 %s39, 1
      %s41 = scalar_select %p38, %s39, %s40
      %p43 = pneg %p38
      %p44 = scmp.eq.s32.totalorder %s18, 1
      %p45 = por %p43, %p44
      %p46 = scmp.ne.s32.totalorder %s39, %s42
      %p47 = scmp.eq.s32.totalorder %s18, 0
      %p48 = por %p46, %p47
      %p49 = scmp.ne.s32.totalorder %s39, %s42
      %p50 = scmp.eq.s32.totalorder %s23, 1
      %p51 = por %p49, %p50
      %p53 = scmp.ne.s32.totalorder %s42, %s52
      %p54 = scmp.eq.s32.totalorder %s23, 0
      %p55 = por %p53, %p54
      %p56 = scmp.lt.s32.totalorder %s18, 2
      // Predicated region
      $region9: #{tpu_custom_call.1} parent=5 // pred_check
        %p57 = pneg %p56
      $region10: #{tpu_custom_call.1} parent=5 // pred_check_branch
        %59 = sbr.rel (%p57) target = $region12
      $region11: #{tpu_custom_call.1} parent=5 // pred_region
        %p60 = pneg %p48
        %p61 = pneg %p45
        %s62 = sand.u32 %s39, 1
        %s63 = scalar_lea.sflag [#allocation6], %s62
        %s64 = sand.u32 %s39, 1
        %s65 = smul.addr %s64, 64
        %s66 = scalar_lea.vmem [#allocation5], %s65
        %s67 = sld [smem:[#allocation4]]
        %v68 = vlaneseq
        %v69 = vshrl.u32 %v68, 7
        %s70 = smul.u32 %s24, 8
        %v71 = vstv %s70
        %v72 = vadd.s32 %v69, %v71
        %v73 = vlaneseq
        %v74 = vand.u32 %v73, 127
        %s75 = smul.u32 %s25, 16
        %v76 = vstv %s75
        %v77 = vadd.s32 %v74, %v76
        %v78 = vstv %s67
        %v79 = vadd.s32 %v72, %v78
        %v80 = vsub.s32 %v77, %v79
        %vm81 = vcmp.lt.s32.totalorder %v80, 0
        %v82 = vsub.s32 0, %v80
        %v83 = vsel %vm81, %v82, %v80
        %v84 = vsub.s32 0, %v83
        %v85 = vcvt.s32.f32 %v84
        %s86 = sld [smem:[#allocation3]]
        %v87 = vstv %s86
        %v88 = vmul.f32 %v87, %v85
        %vm89 = vcmask 130048
        %90 = vst.msk [vmem:[%s66] sm:$0xff] %vm89, %v88
        %s91 = sld [smem:[#allocation3 + $0x1]]
        %v92 = vstv %s91
        %v93 = vmul.f32 %v92, %v85
        %s94 = scalar_lea.vmem %s66, 8 [#allocation5]
        %95 = vst.msk [vmem:[%s94] sm:$0xff] %vm89, %v93
        %s96 = sld [smem:[#allocation3 + $0x2]]
        %v97 = vstv %s96
        %v98 = vmul.f32 %v97, %v85
        %s99 = scalar_lea.vmem %s66, 16 [#allocation5]
        %100 = vst.msk [vmem:[%s99] sm:$0xff] %vm89, %v98
        %s101 = sld [smem:[#allocation3 + $0x3]]
        %v102 = vstv %s101
        %v103 = vmul.f32 %v102, %v85
        %s104 = scalar_lea.vmem %s66, 24 [#allocation5]
        %105 = vst.msk [vmem:[%s104] sm:$0xff] %vm89, %v103
        %s106 = sld [smem:[#allocation3 + $0x4]]
        %v107 = vstv %s106
        %v108 = vmul.f32 %v107, %v85
        %s109 = scalar_lea.vmem %s66, 32 [#allocation5]
        %110 = vst.msk [vmem:[%s109] sm:$0xff] %vm89, %v108
        %s111 = sld [smem:[#allocation3 + $0x5]]
        %v112 = vstv %s111
        %v113 = vmul.f32 %v112, %v85
        %s114 = scalar_lea.vmem %s66, 40 [#allocation5]
        %115 = vst.msk [vmem:[%s114] sm:$0xff] %vm89, %v113
        %s116 = sld [smem:[#allocation3 + $0x6]]
        %v117 = vstv %s116
        %v118 = vmul.f32 %v117, %v85
        %s119 = scalar_lea.vmem %s66, 48 [#allocation5]
        %120 = vst.msk [vmem:[%s119] sm:$0xff] %vm89, %v118
        %s121 = sld [smem:[#allocation3 + $0x7]]
        %v122 = vstv %s121
        %v123 = vmul.f32 %v122, %v85
        %s124 = scalar_lea.vmem %s66, 56 [#allocation5]
        %125 = vst.msk [vmem:[%s124] sm:$0xff] %vm89, %v123
        %s126 = sand.u32 %s39, 1
        %s127 = scalar_lea.sflag [#allocation6], %s126
        %s128 = sand.u32 %s39, 1
        %s129 = smul.addr %s128, 64
        %s130 = scalar_lea.vmem [#allocation5], %s129
        // Predicated region
        $region13: #{tpu_custom_call.1} parent=11 // pred_check
          %p131 = pneg %p45
        $region14: #{tpu_custom_call.1} parent=11 // pred_check_branch
          %133 = sbr.rel (%p131) target = $region16
        $region15: #{tpu_custom_call.1} parent=11 // pred_region
          %s135 = ssub.s32 1024, 1024
          %136 = vsyncadd %s127, %s135
          %s137 = sadd.s32 %s25, %s24
          %s138 = smul.addr %s137, 128
          %s139 = scalar_lea.hbm %s2, %s138
          %s140 = sshll.u32 %s130, 4
          %s141 = int_to_ptr.vmem [resolvable:$true] %s140
          %146 = dma.vmem_to_hbm [thread:$0]  %s141, 1024, %s139, %s127, 128, 256, 8
        $region16: #{tpu_custom_call.1} parent=11 // pred_fallthru
          _
      $region12: #{tpu_custom_call.1} parent=5 // pred_fallthru
        _
      %p147 = scmp.le.s32.totalorder 1, %s18
      // Predicated region
      $region17: #{tpu_custom_call.1} parent=5 // pred_check
        %p148 = pneg %p147
      $region18: #{tpu_custom_call.1} parent=5 // pred_check_branch
        %150 = sbr.rel (%p148) target = $region20
      $region19: #{tpu_custom_call.1} parent=5 // pred_region
        %s151 = ssub.s32 %s18, 1
        // Predicated region
        $region21: #{tpu_custom_call.1} parent=19 // pred_check
          %p152 = pneg %p51
        $region22: #{tpu_custom_call.1} parent=19 // pred_check_branch
          %154 = sbr.rel (%p152) target = $region24
        $region23: #{tpu_custom_call.1} parent=19 // pred_region
          %s155 = sand.u32 %s42, 1
          %s156 = scalar_lea.sflag [#allocation6], %s155
          %s157 = sand.u32 %s42, 1
          %s158 = smul.addr %s157, 64
          %s159 = scalar_lea.vmem [#allocation5], %s158
          %160 = dma.done %s156, 1024
        $region24: #{tpu_custom_call.1} parent=19 // pred_fallthru
          _
      $region20: #{tpu_custom_call.1} parent=5 // pred_fallthru
        _
    $region6: #{tpu_custom_call.1} parent=1 // loop_footer
      %s22 = sadd.s32 1, %s18
    $region7: #{tpu_custom_call.1} parent=1 // loop_footer_branch
      %17 = sbr.rel target = $region3
    $region8: #{tpu_custom_call.1} parent=1 // loop_exit
      _
    %161 = vsyncpa [#allocation6], 1
    %s162 = scalar_lea.sflag [#allocation6], 1
    %163 = vsyncpa %s162, 1

</llo_original>
